<compile_context>
chip_gen: v7x
topology: tpu7x:2x2x1
jax: 0.10.0
libtpu: 0.0.40
codegen_flags: <defaults>
</compile_context>

<pallas_src>
import functools

import jax
import jax.numpy as jnp
import numpy as np
from jax.experimental import pallas as pl
from jax.experimental.pallas import tpu as pltpu


def _round_up(n, m):
    return ((n + m - 1) // m) * m


def _cdiv(a, b):
    return -(-a // b)


# ----------------------------------------------------------------------------- kernel
def _lilith_kernel(x_ref,
                   w1_ref, b1_ref, w2_ref, b2_ref,      # feature_layer
                   wh1_ref, bh1_ref,                    # fused adv+value head layer 1
                   wa2_ref, ba2_ref,                    # advantage head layer 2 (bias pre-shifted)
                   vcol_ref,                            # f32 column: folds (value - adv.mean)
                   q_ref, *, hp):
    """One batch tile. Matmuls are bf16 x bf16 -> f32 accumulation on the MXU."""
    cd = w1_ref.dtype
    x = x_ref[...].astype(cd)                            # in-kernel f32 -> bf16 cast

    # feature_layer: Linear -> ReLU -> Linear -> ReLU
    h = jnp.dot(x, w1_ref[...], preferred_element_type=jnp.float32) + b1_ref[...]
    h = jnp.maximum(h, 0.0).astype(cd)
    r = jnp.dot(h, w2_ref[...], preferred_element_type=jnp.float32) + b2_ref[...]
    r = jnp.maximum(r, 0.0).astype(cd)

    # heads, first layer (fused): [wa1 | wv1] -> single (TB, 2*Hp) matmul
    f = jnp.dot(r, wh1_ref[...], preferred_element_type=jnp.float32) + bh1_ref[...]
    f = jnp.maximum(f, 0.0)                              # (TB, 2*Hp) f32

    # advantage second layer: (TB, Hp) @ (Hp, Op); bias already includes
    # (bv2 - mean(ba2)).
    adv = jnp.dot(f[:, :hp].astype(cd), wa2_ref[...],
                  preferred_element_type=jnp.float32) + ba2_ref[...]

    # (value - advantage.mean) folded into one f32 column over the fused f:
    # vcol[:Hp]  = -colsum(wa2)/out_dim, vcol[Hp:] = wv2.  VPU mul + XLU reduce,
    # no extra MXU work and no N=1 matmul.
    vm = jnp.sum(f * vcol_ref[...], axis=1, keepdims=True)   # (TB, 1) f32

    # Q = value + advantage - advantage.mean(dim=1, keepdim=True)
    q_ref[...] = (adv + vm).astype(q_ref.dtype)


# ----------------------------------------------------------------------------- params
def _linear_params(key, fan_in, fan_out):
    """Deterministic PyTorch-style Linear init; weight stored as (in, out)."""
    kw, kb = jax.random.split(key)
    bound = 1.0 / np.sqrt(fan_in)
    w = jax.random.uniform(kw, (fan_in, fan_out), jnp.float32, -bound, bound)
    b = jax.random.uniform(kb, (1, fan_out), jnp.float32, -bound, bound)
    return w, b


def init_lilith_params(key, in_dim, out_dim, hidden_size):
    keys = jax.random.split(key, 6)
    w1, b1 = _linear_params(keys[0], in_dim, hidden_size)
    w2, b2 = _linear_params(keys[1], hidden_size, hidden_size)
    wa1, ba1 = _linear_params(keys[2], hidden_size, hidden_size)
    wa2, ba2 = _linear_params(keys[3], hidden_size, out_dim)
    wv1, bv1 = _linear_params(keys[4], hidden_size, hidden_size)
    wv2, bv2 = _linear_params(keys[5], hidden_size, 1)
    return dict(w1=w1, b1=b1, w2=w2, b2=b2,
                wa1=wa1, ba1=ba1, wa2=wa2, ba2=ba2,
                wv1=wv1, bv1=bv1, wv2=wv2, bv2=bv2)


def prepare_lilith_params(p, compute_dtype=jnp.bfloat16):
    """Pad to MXU-friendly lane widths, fuse heads, fold the dueling mean, cast.

    Runs ONCE (not per forward call). Biases / vcol stay f32; matmul weights ->
    compute_dtype.
    """
    in_dim, hidden = p["w1"].shape
    out_dim = p["wa2"].shape[1]

    # TODO(synk): on v6e/v7x a 2x256^2 MXU is only half-used at Hp=128; padding
    # Hp to 256 for tiny nets is possible but only pays when matmuls dominate.
    Hp = _round_up(hidden, 128)   # padded hidden width
    Op = _round_up(out_dim, 128)  # padded advantage width (lane-dense output)

    def pad2(w, rows, cols):
        out = jnp.zeros((rows, cols), jnp.float32)
        return out.at[:w.shape[0], :w.shape[1]].set(w)

    w1 = pad2(p["w1"], in_dim, Hp)
    b1 = pad2(p["b1"], 1, Hp)
    w2 = pad2(p["w2"], Hp, Hp)
    b2 = pad2(p["b2"], 1, Hp)

    # head layer 1: [wa1 | wv1] -> (Hp, 2*Hp)
    wh1 = jnp.concatenate([pad2(p["wa1"], Hp, Hp), pad2(p["wv1"], Hp, Hp)], axis=1)
    bh1 = jnp.concatenate([pad2(p["ba1"], 1, Hp), pad2(p["bv1"], 1, Hp)], axis=1)

    # advantage layer 2 (only!); output bias also carries (bv2 - mean(ba2)),
    # broadcast to every lane (padded lanes are sliced off anyway).
    wa2 = pad2(p["wa2"], Hp, Op)
    ba2 = pad2(p["ba2"], 1, Op) + (p["bv2"][0, 0] - jnp.mean(p["ba2"]))

    # f32 column folding (value - advantage.mean) into a VPU dot over f:
    #   vcol[:hidden]        = -sum_j wa2[:, j] / out_dim
    #   vcol[Hp:Hp+hidden]   =  wv2[:, 0]
    vcol = jnp.zeros((1, 2 * Hp), jnp.float32)
    vcol = vcol.at[0, :hidden].set(-jnp.sum(p["wa2"], axis=1) / out_dim)
    vcol = vcol.at[0, Hp:Hp + hidden].set(p["wv2"][:, 0])

    cd = compute_dtype
    return dict(
        w1=w1.astype(cd), b1=b1, w2=w2.astype(cd), b2=b2,
        wh1=wh1.astype(cd), bh1=bh1, wa2=wa2.astype(cd), ba2=ba2, vcol=vcol,
        in_dim=in_dim, out_dim=out_dim, hidden_pad=Hp, out_pad=Op,
        compute_dtype=cd,
    )


# ----------------------------------------------------------------------------- forward
def lilith_forward(x, prep, *, batch_tile=512):
    """x: any-rank input with leading batch dim (e.g. NCHW). Returns (B, out_dim) f32."""
    B = x.shape[0]
    in_dim = prep["in_dim"]
    out_dim = prep["out_dim"]
    Hp = prep["hidden_pad"]
    Op = prep["out_pad"]

    # torch.flatten(x, start_dim=1); keep f32 -- the bf16 cast happens in-kernel.
    x2d = x.reshape(B, -1).astype(jnp.float32)
    assert x2d.shape[1] == in_dim

    # Batch tiling: no padding / no extra HBM copy. Partial final block is
    # masked by Pallas (rows are independent so garbage rows can't pollute
    # valid ones). tb rounded to 16 (bf16 sublane pack); grid >= 2 for B >= 32
    # so the "parallel" axis splits across both TensorCores on v7x.
    if B <= 16:
        tb = B
    else:
        tb = min(batch_tile, max(16, _round_up(_cdiv(B, 2), 16)))

    weights = (prep["w1"], prep["b1"], prep["w2"], prep["b2"],
               prep["wh1"], prep["bh1"], prep["wa2"], prep["ba2"], prep["vcol"])
    weight_bytes = sum(int(np.prod(w.shape)) * w.dtype.itemsize for w in weights)

    # VMEM budget: double-buffered f32 x tile (+ in-kernel bf16 copy),
    # double-buffered f32 Q tile, weights (assume 2 buffers each to be safe),
    # f32 + bf16 intermediates (h, r, f, adv), plus slack.
    def est_vmem(tb_):
        x_bytes = 2 * tb_ * in_dim * 4 + tb_ * in_dim * 2
        q_bytes = 2 * tb_ * Op * 4
        inter = tb_ * (4 * Hp) * (4 + 2) + tb_ * Op * 4
        return x_bytes + q_bytes + 2 * weight_bytes + inter + (4 << 20)

    try:
        phys_vmem = int(getattr(pltpu.get_tpu_info(), "vmem_capacity_bytes", 64 << 20))
    except Exception:  # pragma: no cover - conservative fallback
        phys_vmem = 64 << 20
    vmem_cap = max(32 << 20, phys_vmem - (16 << 20))   # leave compiler headroom

    # Shrink the batch tile if the estimate would not fit (mostly a v7x /
    # huge-in_dim concern).
    # TODO(synk): K-splitting of the first matmul for extremely large flattened
    # in_dim (and pl.Buffered(1) on resident weights) not implemented.
    while tb > 16 and est_vmem(tb) > vmem_cap:
        tb = max(16, _round_up(tb // 2, 16))
    grid_b = _cdiv(B, tb)
    vmem_limit = int(min(vmem_cap, max(32 << 20, est_vmem(tb))))

    def resident(a):  # same block every grid step -> stays VMEM-resident
        return pl.BlockSpec(a.shape, lambda i: (0, 0))

    in_specs = ([pl.BlockSpec((tb, in_dim), lambda i: (i, 0))]
                + [resident(w) for w in weights])
    out_specs = pl.BlockSpec((tb, Op), lambda i: (i, 0))

    flops = int(2 * B * (in_dim * Hp + Hp * Hp + Hp * 2 * Hp + Hp * Op))
    bytes_acc = int(B * in_dim * 4 + weight_bytes + B * Op * 4)

    kernel = functools.partial(_lilith_kernel, hp=Hp)

    # TODO(synk): dueling=False (advantage-only) variant not implemented.
    q_pad = pl.pallas_call(
        kernel,
        out_shape=jax.ShapeDtypeStruct((B, Op), jnp.float32),
        grid=(grid_b,),
        in_specs=in_specs,
        out_specs=out_specs,
        compiler_params=pltpu.CompilerParams(
            dimension_semantics=("parallel",),
            vmem_limit_bytes=vmem_limit,
        ),
        cost_estimate=pl.CostEstimate(
            flops=flops, transcendentals=0, bytes_accessed=bytes_acc),
    )(x2d, *weights)

    return q_pad[:, :out_dim]


# ----------------------------------------------------------------------------- reference
def lilith_reference(x, p, compute_dtype=jnp.float32):
    """Pure-JAX reference; compute_dtype lets it mirror the kernel's bf16 operands."""
    B = x.shape[0]
    cd = compute_dtype

    def dot(a, w):
        return jnp.dot(a.astype(cd), w.astype(cd), preferred_element_type=jnp.float32)

    h = x.reshape(B, -1).astype(jnp.float32)
    h = jnp.maximum(dot(h, p["w1"]) + p["b1"], 0.0)
    r = jnp.maximum(dot(h, p["w2"]) + p["b2"], 0.0)
    adv = dot(jnp.maximum(dot(r, p["wa1"]) + p["ba1"], 0.0), p["wa2"]) + p["ba2"]
    val = dot(jnp.maximum(dot(r, p["wv1"]) + p["bv1"], 0.0), p["wv2"]) + p["bv2"]
    return val + adv - jnp.mean(adv, axis=1, keepdims=True)


# ----------------------------------------------------------------------------- main
if __name__ == "__main__":
    key = jax.random.PRNGKey(0)
    k_x, k_p = jax.random.split(key)

    # Small shapes: batch=4, channels=4, spatial=4 -> in_dim = 4*4*4 = 64
    B, C, H, W = 4, 4, 4, 4
    in_dim, out_dim, hidden = C * H * W, 8, 32

    x = jax.random.normal(k_x, (B, C, H, W), jnp.float32)
    params = init_lilith_params(k_p, in_dim, out_dim, hidden)
    prep = prepare_lilith_params(params)          # pad + fuse + fold mean + bf16 cast, once

    q = lilith_forward(x, prep)
    jax.block_until_ready(q)

    # Validate against a reference using bf16 operands / f32 accumulation like
    # the kernel. Tolerance slightly looser than before because the folded
    # advantage-mean column uses f32 wa2 sums while adv itself uses bf16 wa2.
    q_ref = lilith_reference(x, params, compute_dtype=jnp.bfloat16)
    np.testing.assert_allclose(np.asarray(q), np.asarray(q_ref), rtol=1e-2, atol=1e-2)

    print("KERNEL_OK")
</pallas_src>

<mosaic_0001>
module attributes {stable_mosaic.version = 11 : i64} {
  func.func @_lilith_kernel(%arg0: i32, %arg1: memref<4x64xf32, #tpu.memory_space<vmem>>, %arg2: memref<64x128xbf16, #tpu.memory_space<vmem>>, %arg3: memref<1x128xf32, #tpu.memory_space<vmem>>, %arg4: memref<128x128xbf16, #tpu.memory_space<vmem>>, %arg5: memref<1x128xf32, #tpu.memory_space<vmem>>, %arg6: memref<128x256xbf16, #tpu.memory_space<vmem>>, %arg7: memref<1x256xf32, #tpu.memory_space<vmem>>, %arg8: memref<128x128xbf16, #tpu.memory_space<vmem>>, %arg9: memref<1x128xf32, #tpu.memory_space<vmem>>, %arg10: memref<1x256xf32, #tpu.memory_space<vmem>>, %arg11: memref<4x128xf32, #tpu.memory_space<vmem>>) attributes {dimension_semantics = [#tpu.dimension_semantics<parallel>], iteration_bounds = array<i64: 1>, scalar_prefetch = 0 : i64, scratch_operands = 0 : i64, tpu.core_type = #tpu.core_type<tc>, window_params = [{transform_indices = @transform_0, window_bounds = array<i64: 4, 64>}, {pipeline_mode = #tpu.pipeline_mode<synchronous>, transform_indices = @transform_1, window_bounds = array<i64: 64, 128>}, {pipeline_mode = #tpu.pipeline_mode<synchronous>, transform_indices = @transform_2, window_bounds = array<i64: 1, 128>}, {pipeline_mode = #tpu.pipeline_mode<synchronous>, transform_indices = @transform_3, window_bounds = array<i64: 128, 128>}, {pipeline_mode = #tpu.pipeline_mode<synchronous>, transform_indices = @transform_4, window_bounds = array<i64: 1, 128>}, {pipeline_mode = #tpu.pipeline_mode<synchronous>, transform_indices = @transform_5, window_bounds = array<i64: 128, 256>}, {pipeline_mode = #tpu.pipeline_mode<synchronous>, transform_indices = @transform_6, window_bounds = array<i64: 1, 256>}, {pipeline_mode = #tpu.pipeline_mode<synchronous>, transform_indices = @transform_7, window_bounds = array<i64: 128, 128>}, {pipeline_mode = #tpu.pipeline_mode<synchronous>, transform_indices = @transform_8, window_bounds = array<i64: 1, 128>}, {pipeline_mode = #tpu.pipeline_mode<synchronous>, transform_indices = @transform_9, window_bounds = array<i64: 1, 256>}, {transform_indices = @transform_10, window_bounds = array<i64: 4, 128>}]} {
    %c0 = arith.constant 0 : index
    %c0_0 = arith.constant 0 : index
    %0 = vector.load %arg1[%c0, %c0_0] : memref<4x64xf32, #tpu.memory_space<vmem>>, vector<4x64xf32>
    %1 = arith.truncf %0 : vector<4x64xf32> to vector<4x64xbf16>
    %c0_1 = arith.constant 0 : index
    %c0_2 = arith.constant 0 : index
    %2 = vector.load %arg2[%c0_1, %c0_2] : memref<64x128xbf16, #tpu.memory_space<vmem>>, vector<64x128xbf16>
    %cst = arith.constant dense<0.000000e+00> : vector<4x128xf32>
    %3 = tpu.matmul %1, %2, %cst {dimension_numbers = #tpu.dot_dimension_numbers<[1], [0], [0], [1], [0, 0, 1, 1], [], []>} : vector<4x64xbf16>, vector<64x128xbf16>, vector<4x128xf32> -> vector<4x128xf32>
    %c0_3 = arith.constant 0 : index
    %c0_4 = arith.constant 0 : index
    %4 = vector.load %arg3[%c0_3, %c0_4] : memref<1x128xf32, #tpu.memory_space<vmem>>, vector<1x128xf32>
    %5 = vector.broadcast %4 : vector<1x128xf32> to vector<4x128xf32>
    %6 = arith.addf %3, %5 : vector<4x128xf32>
    %cst_5 = arith.constant 0.000000e+00 : f32
    %7 = vector.broadcast %cst_5 : f32 to vector<4x128xf32>
    %8 = arith.maximumf %6, %7 : vector<4x128xf32>
    %9 = arith.truncf %8 : vector<4x128xf32> to vector<4x128xbf16>
    %c0_6 = arith.constant 0 : index
    %c0_7 = arith.constant 0 : index
    %10 = vector.load %arg4[%c0_6, %c0_7] : memref<128x128xbf16, #tpu.memory_space<vmem>>, vector<128x128xbf16>
    %cst_8 = arith.constant dense<0.000000e+00> : vector<4x128xf32>
    %11 = tpu.matmul %9, %10, %cst_8 {dimension_numbers = #tpu.dot_dimension_numbers<[1], [0], [0], [1], [0, 0, 1, 1], [], []>} : vector<4x128xbf16>, vector<128x128xbf16>, vector<4x128xf32> -> vector<4x128xf32>
    %c0_9 = arith.constant 0 : index
    %c0_10 = arith.constant 0 : index
    %12 = vector.load %arg5[%c0_9, %c0_10] : memref<1x128xf32, #tpu.memory_space<vmem>>, vector<1x128xf32>
    %13 = vector.broadcast %12 : vector<1x128xf32> to vector<4x128xf32>
    %14 = arith.addf %11, %13 : vector<4x128xf32>
    %cst_11 = arith.constant 0.000000e+00 : f32
    %15 = vector.broadcast %cst_11 : f32 to vector<4x128xf32>
    %16 = arith.maximumf %14, %15 : vector<4x128xf32>
    %17 = arith.truncf %16 : vector<4x128xf32> to vector<4x128xbf16>
    %c0_12 = arith.constant 0 : index
    %c0_13 = arith.constant 0 : index
    %18 = vector.load %arg6[%c0_12, %c0_13] : memref<128x256xbf16, #tpu.memory_space<vmem>>, vector<128x256xbf16>
    %cst_14 = arith.constant dense<0.000000e+00> : vector<4x256xf32>
    %19 = tpu.matmul %17, %18, %cst_14 {dimension_numbers = #tpu.dot_dimension_numbers<[1], [0], [0], [1], [0, 0, 1, 1], [], []>} : vector<4x128xbf16>, vector<128x256xbf16>, vector<4x256xf32> -> vector<4x256xf32>
    %c0_15 = arith.constant 0 : index
    %c0_16 = arith.constant 0 : index
    %20 = vector.load %arg7[%c0_15, %c0_16] : memref<1x256xf32, #tpu.memory_space<vmem>>, vector<1x256xf32>
    %21 = vector.broadcast %20 : vector<1x256xf32> to vector<4x256xf32>
    %22 = arith.addf %19, %21 : vector<4x256xf32>
    %cst_17 = arith.constant 0.000000e+00 : f32
    %23 = vector.broadcast %cst_17 : f32 to vector<4x256xf32>
    %24 = arith.maximumf %22, %23 : vector<4x256xf32>
    %25 = vector.extract_strided_slice %24 {offsets = [0, 0], sizes = [4, 128], strides = [1, 1]} : vector<4x256xf32> to vector<4x128xf32>
    %26 = arith.truncf %25 : vector<4x128xf32> to vector<4x128xbf16>
    %c0_18 = arith.constant 0 : index
    %c0_19 = arith.constant 0 : index
    %27 = vector.load %arg8[%c0_18, %c0_19] : memref<128x128xbf16, #tpu.memory_space<vmem>>, vector<128x128xbf16>
    %cst_20 = arith.constant dense<0.000000e+00> : vector<4x128xf32>
    %28 = tpu.matmul %26, %27, %cst_20 {dimension_numbers = #tpu.dot_dimension_numbers<[1], [0], [0], [1], [0, 0, 1, 1], [], []>} : vector<4x128xbf16>, vector<128x128xbf16>, vector<4x128xf32> -> vector<4x128xf32>
    %c0_21 = arith.constant 0 : index
    %c0_22 = arith.constant 0 : index
    %29 = vector.load %arg9[%c0_21, %c0_22] : memref<1x128xf32, #tpu.memory_space<vmem>>, vector<1x128xf32>
    %30 = vector.broadcast %29 : vector<1x128xf32> to vector<4x128xf32>
    %31 = arith.addf %28, %30 : vector<4x128xf32>
    %c0_23 = arith.constant 0 : index
    %c0_24 = arith.constant 0 : index
    %32 = vector.load %arg10[%c0_23, %c0_24] : memref<1x256xf32, #tpu.memory_space<vmem>>, vector<1x256xf32>
    %33 = vector.broadcast %32 : vector<1x256xf32> to vector<4x256xf32>
    %34 = arith.mulf %24, %33 : vector<4x256xf32>
    %cst_25 = arith.constant dense<0.000000e+00> : vector<4xf32>
    %35 = vector.multi_reduction <add>, %34, %cst_25 [1] : vector<4x256xf32> to vector<4xf32>
    %36 = vector.shape_cast %35 : vector<4xf32> to vector<4x1xf32>
    %37 = vector.broadcast %36 : vector<4x1xf32> to vector<4x128xf32>
    %38 = arith.addf %31, %37 : vector<4x128xf32>
    %c0_26 = arith.constant 0 : index
    %c0_27 = arith.constant 0 : index
    %39 = vector.load %arg11[%c0_26, %c0_27] : memref<4x128xf32, #tpu.memory_space<vmem>>, vector<4x128xf32>
    tpu.vector_store %arg11[%c0_26, %c0_27], %38 {strides = array<i32>} : memref<4x128xf32, #tpu.memory_space<vmem>>, vector<4x128xf32>,
    return
  }
  func.func @transform_0(%arg0: i32) -> (i32, i32) {
    %c0_i32 = arith.constant 0 : i32
    %c0_i32_0 = arith.constant 0 : i32
    return %arg0, %c0_i32 : i32, i32
  }
  func.func @transform_1(%arg0: i32) -> (i32, i32) {
    %c0_i32 = arith.constant 0 : i32
    %c0_i32_0 = arith.constant 0 : i32
    %c0_i32_1 = arith.constant 0 : i32
    return %c0_i32, %c0_i32_0 : i32, i32
  }
  func.func @transform_2(%arg0: i32) -> (i32, i32) {
    %c0_i32 = arith.constant 0 : i32
    %c0_i32_0 = arith.constant 0 : i32
    %c0_i32_1 = arith.constant 0 : i32
    return %c0_i32, %c0_i32_0 : i32, i32
  }
  func.func @transform_3(%arg0: i32) -> (i32, i32) {
    %c0_i32 = arith.constant 0 : i32
    %c0_i32_0 = arith.constant 0 : i32
    %c0_i32_1 = arith.constant 0 : i32
    return %c0_i32, %c0_i32_0 : i32, i32
  }
  func.func @transform_4(%arg0: i32) -> (i32, i32) {
    %c0_i32 = arith.constant 0 : i32
    %c0_i32_0 = arith.constant 0 : i32
    %c0_i32_1 = arith.constant 0 : i32
    return %c0_i32, %c0_i32_0 : i32, i32
  }
  func.func @transform_5(%arg0: i32) -> (i32, i32) {
    %c0_i32 = arith.constant 0 : i32
    %c0_i32_0 = arith.constant 0 : i32
    %c0_i32_1 = arith.constant 0 : i32
    return %c0_i32, %c0_i32_0 : i32, i32
  }
  func.func @transform_6(%arg0: i32) -> (i32, i32) {
    %c0_i32 = arith.constant 0 : i32
    %c0_i32_0 = arith.constant 0 : i32
    %c0_i32_1 = arith.constant 0 : i32
    return %c0_i32, %c0_i32_0 : i32, i32
  }
  func.func @transform_7(%arg0: i32) -> (i32, i32) {
    %c0_i32 = arith.constant 0 : i32
    %c0_i32_0 = arith.constant 0 : i32
    %c0_i32_1 = arith.constant 0 : i32
    return %c0_i32, %c0_i32_0 : i32, i32
  }
  func.func @transform_8(%arg0: i32) -> (i32, i32) {
    %c0_i32 = arith.constant 0 : i32
    %c0_i32_0 = arith.constant 0 : i32
    %c0_i32_1 = arith.constant 0 : i32
    return %c0_i32, %c0_i32_0 : i32, i32
  }
  func.func @transform_9(%arg0: i32) -> (i32, i32) {
    %c0_i32 = arith.constant 0 : i32
    %c0_i32_0 = arith.constant 0 : i32
    %c0_i32_1 = arith.constant 0 : i32
    return %c0_i32, %c0_i32_0 : i32, i32
  }
  func.func @transform_10(%arg0: i32) -> (i32, i32) {
    %c0_i32 = arith.constant 0 : i32
    %c0_i32_0 = arith.constant 0 : i32
    return %arg0, %c0_i32 : i32, i32
  }
}

</mosaic_0001>

<llo_original>
// kernel: tpu_custom_call.1
$region0: #{tpu_custom_call.1}
  #allocation0 [shape = 'u32[]', space=smem, size = 0x4, offset = 0x4, fixed_abs, tag = 'smem constant byte address 0x4 - core index']
  #allocation1 [shape = 'u32[144,128]{1,0:T(1,128)}', space=vmem, size = 0x12000, scoped, tag = 'internal scratch']
  %s0 = inlined_call_operand.hbm [shape: f32[4,64], index: 0, kind: input, shape index: {}]
  %s1 = inlined_call_operand.hbm [shape: bf16[64,128], index: 1, kind: input, shape index: {}]
  %s2 = inlined_call_operand.vmem [shape: f32[1,128], index: 2, kind: input, shape index: {}]
  %s3 = inlined_call_operand.hbm [shape: bf16[128,128], index: 3, kind: input, shape index: {}]
  %s4 = inlined_call_operand.vmem [shape: f32[1,128], index: 4, kind: input, shape index: {}]
  %s5 = inlined_call_operand.hbm [shape: bf16[128,256], index: 5, kind: input, shape index: {}]
  %s6 = inlined_call_operand.vmem [shape: f32[1,256], index: 6, kind: input, shape index: {}]
  %s7 = inlined_call_operand.hbm [shape: bf16[128,128], index: 7, kind: input, shape index: {}]
  %s8 = inlined_call_operand.vmem [shape: f32[1,128], index: 8, kind: input, shape index: {}]
  %s9 = inlined_call_operand.vmem [shape: f32[1,256], index: 9, kind: input, shape index: {}]
  %s10 = inlined_call_operand.hbm [shape: f32[4,128], index: 10, kind: output, shape index: {}]
  %s11 = sld [smem:[#allocation0]]
  $region70: #{tpu_custom_call.1} parent=0
    _
  %s13 = ssub.s32 1, %s11
  %s14 = scalar_select 0, %s13, %s11
  $region1: #{tpu_custom_call.1} parent=0
    #allocation2 [shape = 'u8[2048]{0}', space=vmem, size = 0x800, scoped, tag = 'input window, operand 0, single buffered']
    #allocation3 [shape = 's32[1]{0}', space=sflag, size = 0x4, scoped, tag = 'scoped memory for tpu_custom_call.1']
    #allocation4 [shape = 's32[1]{0}', space=sflag, size = 0x4, scoped, tag = 'scoped memory for tpu_custom_call.1']
    #allocation5 [shape = 'u8[16384]{0}', space=vmem, size = 0x4000, scoped, tag = 'input window, operand 1, single buffered']
    #allocation6 [shape = 's32[1]{0}', space=sflag, size = 0x4, scoped, tag = 'scoped memory for tpu_custom_call.1']
    #allocation7 [shape = 'u8[32768]{0}', space=vmem, size = 0x8000, scoped, tag = 'input window, operand 3, single buffered']
    #allocation8 [shape = 'u8[65536]{0}', space=vmem, size = 0x10000, scoped, tag = 'input window, operand 5, single buffered']
    #allocation9 [shape = 's32[1]{0}', space=sflag, size = 0x4, scoped, tag = 'scoped memory for tpu_custom_call.1']
    #allocation10 [shape = 'u8[32768]{0}', space=vmem, size = 0x8000, scoped, tag = 'input window, operand 7, single buffered']
    #allocation11 [shape = 'u8[2048]{0}', space=vmem, size = 0x800, scoped, tag = 'output window, operand 0, single buffered']
    %15 = vsyncpa [#allocation3], 0
    %16 = vsyncpa [#allocation6], 0
    %17 = vsyncpa [#allocation9], 0
    %18 = vsyncpa [#allocation4], 0
    // Predicated region
    $region2: #{tpu_custom_call.1} parent=1 // pred_check
      _
    $region3: #{tpu_custom_call.1} parent=1 // pred_check_branch
      %20 = sbr.rel (0) target = $region5
    $region4: #{tpu_custom_call.1} parent=1 // pred_region
      %s22 = ssub.s32 64, 64
      %23 = vsyncadd [#allocation3], %s22
      %s25 = sshll.u32 [#allocation2], 4
      %s26 = int_to_ptr.vmem [resolvable:$true] %s25
      %28 = dma.hbm_to_vmem [thread:$0]  %s0, 64, %s26, [#allocation3]
    $region5: #{tpu_custom_call.1} parent=1 // pred_fallthru
      _
    // Predicated region
    $region6: #{tpu_custom_call.1} parent=1 // pred_check
      _
    $region7: #{tpu_custom_call.1} parent=1 // pred_check_branch
      %30 = sbr.rel (0) target = $region9
    $region8: #{tpu_custom_call.1} parent=1 // pred_region
      %s32 = ssub.s32 512, 512
      %33 = vsyncadd [#allocation6], %s32
      %s34 = sshll.u32 [#allocation5], 4
      %s35 = int_to_ptr.vmem [resolvable:$true] %s34
      %40 = dma.hbm_to_vmem [thread:$0]  %s1, 512, %s35, [#allocation6], 64, 64, 4
    $region9: #{tpu_custom_call.1} parent=1 // pred_fallthru
      _
    // Predicated region
    $region10: #{tpu_custom_call.1} parent=1 // pred_check
      _
    $region11: #{tpu_custom_call.1} parent=1 // pred_check_branch
      %42 = sbr.rel (0) target = $region13
    $region12: #{tpu_custom_call.1} parent=1 // pred_region
      _
    $region13: #{tpu_custom_call.1} parent=1 // pred_fallthru
      _
    // Predicated region
    $region14: #{tpu_custom_call.1} parent=1 // pred_check
      _
    $region15: #{tpu_custom_call.1} parent=1 // pred_check_branch
      %44 = sbr.rel (0) target = $region17
    $region16: #{tpu_custom_call.1} parent=1 // pred_region
      %s46 = ssub.s32 1024, 1024
      %47 = vsyncadd [#allocation6], %s46
      %s48 = sshll.u32 [#allocation7], 4
      %s49 = int_to_ptr.vmem [resolvable:$true] %s48
      %54 = dma.hbm_to_vmem [thread:$0]  %s3, 1024, %s49, [#allocation6], 64, 64, 4
    $region17: #{tpu_custom_call.1} parent=1 // pred_fallthru
      _
    // Predicated region
    $region18: #{tpu_custom_call.1} parent=1 // pred_check
      _
    $region19: #{tpu_custom_call.1} parent=1 // pred_check_branch
      %56 = sbr.rel (0) target = $region21
    $region20: #{tpu_custom_call.1} parent=1 // pred_region
      _
    $region21: #{tpu_custom_call.1} parent=1 // pred_fallthru
      _
    // Predicated region
    $region22: #{tpu_custom_call.1} parent=1 // pred_check
      _
    $region23: #{tpu_custom_call.1} parent=1 // pred_check_branch
      %58 = sbr.rel (0) target = $region25
    $region24: #{tpu_custom_call.1} parent=1 // pred_region
      %s60 = ssub.s32 2048, 2048
      %61 = vsyncadd [#allocation9], %s60
      %s62 = sshll.u32 [#allocation8], 4
      %s63 = int_to_ptr.vmem [resolvable:$true] %s62
      %68 = dma.hbm_to_vmem [thread:$0]  %s5, 2048, %s63, [#allocation9], 128, 128, 8
    $region25: #{tpu_custom_call.1} parent=1 // pred_fallthru
      _
    // Predicated region
    $region26: #{tpu_custom_call.1} parent=1 // pred_check
      _
    $region27: #{tpu_custom_call.1} parent=1 // pred_check_branch
      %70 = sbr.rel (0) target = $region29
    $region28: #{tpu_custom_call.1} parent=1 // pred_region
      _
    $region29: #{tpu_custom_call.1} parent=1 // pred_fallthru
      _
    // Predicated region
    $region30: #{tpu_custom_call.1} parent=1 // pred_check
      _
    $region31: #{tpu_custom_call.1} parent=1 // pred_check_branch
      %72 = sbr.rel (0) target = $region33
    $region32: #{tpu_custom_call.1} parent=1 // pred_region
      %s74 = ssub.s32 1024, 1024
      %75 = vsyncadd [#allocation9], %s74
      %s76 = sshll.u32 [#allocation10], 4
      %s77 = int_to_ptr.vmem [resolvable:$true] %s76
      %82 = dma.hbm_to_vmem [thread:$0]  %s7, 1024, %s77, [#allocation9], 64, 64, 4
    $region33: #{tpu_custom_call.1} parent=1 // pred_fallthru
      _
    // Predicated region
    $region34: #{tpu_custom_call.1} parent=1 // pred_check
      _
    $region35: #{tpu_custom_call.1} parent=1 // pred_check_branch
      %84 = sbr.rel (0) target = $region37
    $region36: #{tpu_custom_call.1} parent=1 // pred_region
      _
    $region37: #{tpu_custom_call.1} parent=1 // pred_fallthru
      _
    // Predicated region
    $region38: #{tpu_custom_call.1} parent=1 // pred_check
      _
    $region39: #{tpu_custom_call.1} parent=1 // pred_check_branch
      %86 = sbr.rel (0) target = $region41
    $region40: #{tpu_custom_call.1} parent=1 // pred_region
      _
    $region41: #{tpu_custom_call.1} parent=1 // pred_fallthru
      _
    // Predicated region
    $region42: #{tpu_custom_call.1} parent=1 // pred_check
      _
    $region43: #{tpu_custom_call.1} parent=1 // pred_check_branch
      %88 = sbr.rel (0) target = $region45
    $region44: #{tpu_custom_call.1} parent=1 // pred_region
      %89 = dma.done [#allocation3], 64
    $region45: #{tpu_custom_call.1} parent=1 // pred_fallthru
      _
    // Predicated region
    $region46: #{tpu_custom_call.1} parent=1 // pred_check
      _
    $region47: #{tpu_custom_call.1} parent=1 // pred_check_branch
      %91 = sbr.rel (0) target = $region49
    $region48: #{tpu_custom_call.1} parent=1 // pred_region
      %92 = dma.done [#allocation6], 512
    $region49: #{tpu_custom_call.1} parent=1 // pred_fallthru
      _
    // Predicated region
    $region50: #{tpu_custom_call.1} parent=1 // pred_check
      _
    $region51: #{tpu_custom_call.1} parent=1 // pred_check_branch
      %94 = sbr.rel (0) target = $region53
    $region52: #{tpu_custom_call.1} parent=1 // pred_region
      %95 = dma.done [#allocation6], 1024
    $region53: #{tpu_custom_call.1} parent=1 // pred_fallthru
      _
    // Predicated region
    $region54: #{tpu_custom_call.1} parent=1 // pred_check
      _
    $region55: #{tpu_custom_call.1} parent=1 // pred_check_branch
      %97 = sbr.rel (0) target = $region57
    $region56: #{tpu_custom_call.1} parent=1 // pred_region
      %98 = dma.done [#allocation9], 2048
    $region57: #{tpu_custom_call.1} parent=1 // pred_fallthru
      _
    // Predicated region
    $region58: #{tpu_custom_call.1} parent=1 // pred_check
      _
    $region59: #{tpu_custom_call.1} parent=1 // pred_check_branch
      %100 = sbr.rel (0) target = $region61
    $region60: #{tpu_custom_call.1} parent=1 // pred_region
      %101 = dma.done [#allocation9], 1024
    $region61: #{tpu_custom_call.1} parent=1 // pred_fallthru
      _
    %v103 = vld [vmem:[#allocation2] sm:$0xf]
    %v104 = vpack.c.bf16 %v103, %v103
    %v105 = vld [vmem:[#allocation5] sm:$0xf]
    %v106 = vld [vmem:[#allocation5 + $0x4] sm:$0xf]
    %v107 = vld [vmem:[#allocation5 + $0x8] sm:$0xf]
    %v108 = vld [vmem:[#allocation5 + $0xc] sm:$0xf]
    %v109 = vld [vmem:[#allocation5 + $0x10] sm:$0xf]
    %v110 = vld [vmem:[#allocation5 + $0x14] sm:$0xf]
    %v111 = vld [vmem:[#allocation5 + $0x18] sm:$0xf]
    %v112 = vld [vmem:[#allocation5 + $0x1c] sm:$0xf]
    %v113 = vld [vmem:[%s2] sm:$0x1]
    %v115 = vlaneseq
    %v116 = vshrl.u32 %v115, 7
    %v117 = vsub.s32 0, %v116
    %v118 = vrot.slane %v113, %v117
    %v128 = vunpack.c.l.b16 %v105
    %v129 = vunpack.c.l.b16 %v106
    %v130 = vunpack.c.l.b16 %v107
    %v131 = vunpack.c.l.b16 %v108
    %v132 = vunpack.c.l.b16 %v109
    %v133 = vunpack.c.l.b16 %v110
    %v134 = vunpack.c.l.b16 %v111
    %v135 = vunpack.c.l.b16 %v112
    %v136 = vpack.c.b16 %v129, %v128
    %v137 = vpack.c.b16 %v131, %v130
    %v138 = vpack.c.b16 %v133, %v132
    %v139 = vpack.c.b16 %v135, %v134
    %vm144 = vcmask 523264
    %v146 = vsel %vm144, %v104, 0
    %148 = vmatprep.subr.bf16.mxu0 0
    %149 = vmatpush1.bf16.msra.mxu0 %v136
    %150 = vmatprep.subr.bf16.mxu0 0
    %151 = vmatpush1.bf16.msra.mxu0 %v137
    %152 = vmatprep.subr.bf16.mxu0 0
    %153 = vmatpush1.bf16.msra.mxu0 %v138
    %154 = vmatprep.subr.bf16.mxu0 0
    %155 = vmatpush1.bf16.msra.mxu0 %v139
    %156 = vmatprep.subr.bf16.mxu0 0
    %157 = vmatpush1.bf16.msra.mxu0 0
    %158 = vmatprep.subr.bf16.mxu0 0
    %159 = vmatpush1.bf16.msra.mxu0 0
    %160 = vmatprep.subr.bf16.mxu0 0
    %161 = vmatpush1.bf16.msra.mxu0 0
    %162 = vmatprep.subr.bf16.mxu0 0
    %163 = vmatpush1.bf16.msra.mxu0 0
    %164 = vmatprep.subr.bf16.mxu0 0
    %165 = vmatpush1.bf16.msra.mxu0 0
    %166 = vmatprep.subr.bf16.mxu0 0
    %167 = vmatpush1.bf16.msra.mxu0 0
    %168 = vmatprep.subr.bf16.mxu0 0
    %169 = vmatpush1.bf16.msra.mxu0 0
    %170 = vmatprep.subr.bf16.mxu0 0
    %171 = vmatpush1.bf16.msra.mxu0 0
    %172 = vmatprep.subr.bf16.mxu0 0
    %173 = vmatpush1.bf16.msra.mxu0 0
    %174 = vmatprep.subr.bf16.mxu0 0
    %175 = vmatpush1.bf16.msra.mxu0 0
    %176 = vmatprep.subr.bf16.mxu0 0
    %177 = vmatpush1.bf16.msra.mxu0 0
    %178 = vmatprep.subr.bf16.mxu0 0
    %179 = vmatpush1.bf16.msra.mxu0 0
    %180 = vmatprep.mubr.bf16.mxu0 0
    %181 = vmatmul.mubr.bf16.gmra.mrb[0].mxu0 %v146
    %v182 = vpop.f32.mrb[0].mxu0
    %v183 = vadd.f32 %v118, %v182
    %v184 = vpop.f32.mrb[0].mxu0
    %v185 = vpop.f32.mrb[0].mxu0
    %v186 = vpop.f32.mrb[0].mxu0
    %187 = vdwg.mxu0
    %v188 = vmax.f32 %v183, 0.0
    %v189 = vpack.c.bf16 %v188, %v188
    %v190 = vld [vmem:[#allocation7] sm:$0xf]
    %v191 = vld [vmem:[#allocation7 + $0x4] sm:$0xf]
    %v192 = vld [vmem:[#allocation7 + $0x8] sm:$0xf]
    %v193 = vld [vmem:[#allocation7 + $0xc] sm:$0xf]
    %v194 = vld [vmem:[#allocation7 + $0x10] sm:$0xf]
    %v195 = vld [vmem:[#allocation7 + $0x14] sm:$0xf]
    %v196 = vld [vmem:[#allocation7 + $0x18] sm:$0xf]
    %v197 = vld [vmem:[#allocation7 + $0x1c] sm:$0xf]
    %v198 = vld [vmem:[#allocation7 + $0x20] sm:$0xf]
    %v199 = vld [vmem:[#allocation7 + $0x24] sm:$0xf]
    %v200 = vld [vmem:[#allocation7 + $0x28] sm:$0xf]
    %v201 = vld [vmem:[#allocation7 + $0x2c] sm:$0xf]
    %v202 = vld [vmem:[#allocation7 + $0x30] sm:$0xf]
    %v203 = vld [vmem:[#allocation7 + $0x34] sm:$0xf]
    %v204 = vld [vmem:[#allocation7 + $0x38] sm:$0xf]
    %v205 = vld [vmem:[#allocation7 + $0x3c] sm:$0xf]
    %v206 = vld [vmem:[%s4] sm:$0x1]
    %v208 = vlaneseq
    %v209 = vshrl.u32 %v208, 7
    %v210 = vsub.s32 0, %v209
    %v211 = vrot.slane %v206, %v210
    %v229 = vunpack.c.l.b16 %v190
    %v230 = vunpack.c.l.b16 %v191
    %v231 = vunpack.c.l.b16 %v192
    %v232 = vunpack.c.l.b16 %v193
    %v233 = vunpack.c.l.b16 %v194
    %v234 = vunpack.c.l.b16 %v195
    %v235 = vunpack.c.l.b16 %v196
    %v236 = vunpack.c.l.b16 %v197
    %v237 = vunpack.c.l.b16 %v198
    %v238 = vunpack.c.l.b16 %v199
    %v239 = vunpack.c.l.b16 %v200
    %v240 = vunpack.c.l.b16 %v201
    %v241 = vunpack.c.l.b16 %v202
    %v242 = vunpack.c.l.b16 %v203
    %v243 = vunpack.c.l.b16 %v204
    %v244 = vunpack.c.l.b16 %v205
    %v245 = vpack.c.b16 %v230, %v229
    %v246 = vpack.c.b16 %v232, %v231
    %v247 = vpack.c.b16 %v234, %v233
    %v248 = vpack.c.b16 %v236, %v235
    %v249 = vpack.c.b16 %v238, %v237
    %v250 = vpack.c.b16 %v240, %v239
    %v251 = vpack.c.b16 %v242, %v241
    %v252 = vpack.c.b16 %v244, %v243
    %261 = vmatprep.subr.bf16.mxu0 0
    %262 = vmatpush1.bf16.msra.mxu0 %v245
    %263 = vmatprep.subr.bf16.mxu0 0
    %264 = vmatpush1.bf16.msra.mxu0 %v246
    %265 = vmatprep.subr.bf16.mxu0 0
    %266 = vmatpush1.bf16.msra.mxu0 %v247
    %267 = vmatprep.subr.bf16.mxu0 0
    %268 = vmatpush1.bf16.msra.mxu0 %v248
    %269 = vmatprep.subr.bf16.mxu0 0
    %270 = vmatpush1.bf16.msra.mxu0 %v249
    %271 = vmatprep.subr.bf16.mxu0 0
    %272 = vmatpush1.bf16.msra.mxu0 %v250
    %273 = vmatprep.subr.bf16.mxu0 0
    %274 = vmatpush1.bf16.msra.mxu0 %v251
    %275 = vmatprep.subr.bf16.mxu0 0
    %276 = vmatpush1.bf16.msra.mxu0 %v252
    %277 = vmatprep.subr.bf16.mxu0 0
    %278 = vmatpush1.bf16.msra.mxu0 0
    %279 = vmatprep.subr.bf16.mxu0 0
    %280 = vmatpush1.bf16.msra.mxu0 0
    %281 = vmatprep.subr.bf16.mxu0 0
    %282 = vmatpush1.bf16.msra.mxu0 0
    %283 = vmatprep.subr.bf16.mxu0 0
    %284 = vmatpush1.bf16.msra.mxu0 0
    %285 = vmatprep.subr.bf16.mxu0 0
    %286 = vmatpush1.bf16.msra.mxu0 0
    %287 = vmatprep.subr.bf16.mxu0 0
    %288 = vmatpush1.bf16.msra.mxu0 0
    %289 = vmatprep.subr.bf16.mxu0 0
    %290 = vmatpush1.bf16.msra.mxu0 0
    %291 = vmatprep.subr.bf16.mxu0 0
    %292 = vmatpush1.bf16.msra.mxu0 0
    %293 = vmatprep.mubr.bf16.mxu0 0
    %294 = vmatmul.mubr.bf16.gmra.mrb[0].mxu0 %v189
    %v295 = vpop.f32.mrb[0].mxu0
    %v296 = vadd.f32 %v211, %v295
    %v297 = vpop.f32.mrb[0].mxu0
    %v298 = vpop.f32.mrb[0].mxu0
    %v299 = vpop.f32.mrb[0].mxu0
    %300 = vdwg.mxu0
    %v301 = vmax.f32 %v296, 0.0
    %v302 = vpack.c.bf16 %v301, %v301
    %v303 = vld [vmem:[#allocation8] sm:$0xff]
    %v304 = vld [vmem:[#allocation8 + $0x8] sm:$0xff]
    %v305 = vld [vmem:[#allocation8 + $0x10] sm:$0xff]
    %v306 = vld [vmem:[#allocation8 + $0x18] sm:$0xff]
    %v307 = vld [vmem:[#allocation8 + $0x20] sm:$0xff]
    %v308 = vld [vmem:[#allocation8 + $0x28] sm:$0xff]
    %v309 = vld [vmem:[#allocation8 + $0x30] sm:$0xff]
    %v310 = vld [vmem:[#allocation8 + $0x38] sm:$0xff]
    %v311 = vld [vmem:[#allocation8 + $0x40] sm:$0xff]
    %v312 = vld [vmem:[#allocation8 + $0x48] sm:$0xff]
    %v313 = vld [vmem:[#allocation8 + $0x50] sm:$0xff]
    %v314 = vld [vmem:[#allocation8 + $0x58] sm:$0xff]
    %v315 = vld [vmem:[#allocation8 + $0x60] sm:$0xff]
    %v316 = vld [vmem:[#allocation8 + $0x68] sm:$0xff]
    %v317 = vld [vmem:[#allocation8 + $0x70] sm:$0xff]
    %v318 = vld [vmem:[#allocation8 + $0x78] sm:$0xff]
    %v319 = vld [vmem:[%s6] sm:$0x3]
    %v321 = vlaneseq
    %v322 = vshrl.u32 %v321, 7
    %v323 = vsub.s32 0, %v322
    %v324 = vrot.slane %v319, %v323
    %v325 = vlaneseq
    %v326 = vshrl.u32 %v325, 7
    %v327 = vsub.s32 1, %v326
    %v328 = vrot.slane %v319, %v327
    %v347 = vunpack.c.l.b16 %v303
    %v348 = vunpack.c.h.b16 %v303
    %v349 = vunpack.c.l.b16 %v304
    %v350 = vunpack.c.h.b16 %v304
    %v351 = vunpack.c.l.b16 %v305
    %v352 = vunpack.c.h.b16 %v305
    %v353 = vunpack.c.l.b16 %v306
    %v354 = vunpack.c.h.b16 %v306
    %v355 = vunpack.c.l.b16 %v307
    %v356 = vunpack.c.h.b16 %v307
    %v357 = vunpack.c.l.b16 %v308
    %v358 = vunpack.c.h.b16 %v308
    %v359 = vunpack.c.l.b16 %v309
    %v360 = vunpack.c.h.b16 %v309
    %v361 = vunpack.c.l.b16 %v310
    %v362 = vunpack.c.h.b16 %v310
    %v363 = vunpack.c.l.b16 %v311
    %v364 = vunpack.c.h.b16 %v311
    %v365 = vunpack.c.l.b16 %v312
    %v366 = vunpack.c.h.b16 %v312
    %v367 = vunpack.c.l.b16 %v313
    %v368 = vunpack.c.h.b16 %v313
    %v369 = vunpack.c.l.b16 %v314
    %v370 = vunpack.c.h.b16 %v314
    %v371 = vunpack.c.l.b16 %v315
    %v372 = vunpack.c.h.b16 %v315
    %v373 = vunpack.c.l.b16 %v316
    %v374 = vunpack.c.h.b16 %v316
    %v375 = vunpack.c.l.b16 %v317
    %v376 = vunpack.c.h.b16 %v317
    %v377 = vunpack.c.l.b16 %v318
    %v378 = vunpack.c.h.b16 %v318
    %v379 = vpack.c.b16 %v349, %v347
    %v380 = vpack.c.b16 %v350, %v348
    %v381 = vpack.c.b16 %v353, %v351
    %v382 = vpack.c.b16 %v354, %v352
    %v383 = vpack.c.b16 %v357, %v355
    %v384 = vpack.c.b16 %v358, %v356
    %v385 = vpack.c.b16 %v361, %v359
    %v386 = vpack.c.b16 %v362, %v360
    %v387 = vpack.c.b16 %v365, %v363
    %v388 = vpack.c.b16 %v366, %v364
    %v389 = vpack.c.b16 %v369, %v367
    %v390 = vpack.c.b16 %v370, %v368
    %v391 = vpack.c.b16 %v373, %v371
    %v392 = vpack.c.b16 %v374, %v372
    %v393 = vpack.c.b16 %v377, %v375
    %v394 = vpack.c.b16 %v378, %v376
    %411 = vmatprep.subr.bf16.mxu0 %v380
    %412 = vmatpush1.bf16.msra.mxu0 %v379
    %413 = vmatprep.subr.bf16.mxu0 %v382
    %414 = vmatpush1.bf16.msra.mxu0 %v381
    %415 = vmatprep.subr.bf16.mxu0 %v384
    %416 = vmatpush1.bf16.msra.mxu0 %v383
    %417 = vmatprep.subr.bf16.mxu0 %v386
    %418 = vmatpush1.bf16.msra.mxu0 %v385
    %419 = vmatprep.subr.bf16.mxu0 %v388
    %420 = vmatpush1.bf16.msra.mxu0 %v387
    %421 = vmatprep.subr.bf16.mxu0 %v390
    %422 = vmatpush1.bf16.msra.mxu0 %v389
    %423 = vmatprep.subr.bf16.mxu0 %v392
    %424 = vmatpush1.bf16.msra.mxu0 %v391
    %425 = vmatprep.subr.bf16.mxu0 %v394
    %426 = vmatpush1.bf16.msra.mxu0 %v393
    %427 = vmatprep.subr.bf16.mxu0 0
    %428 = vmatpush1.bf16.msra.mxu0 0
    %429 = vmatprep.subr.bf16.mxu0 0
    %430 = vmatpush1.bf16.msra.mxu0 0
    %431 = vmatprep.subr.bf16.mxu0 0
    %432 = vmatpush1.bf16.msra.mxu0 0
    %433 = vmatprep.subr.bf16.mxu0 0
    %434 = vmatpush1.bf16.msra.mxu0 0
    %435 = vmatprep.subr.bf16.mxu0 0
    %436 = vmatpush1.bf16.msra.mxu0 0
    %437 = vmatprep.subr.bf16.mxu0 0
    %438 = vmatpush1.bf16.msra.mxu0 0
    %439 = vmatprep.subr.bf16.mxu0 0
    %440 = vmatpush1.bf16.msra.mxu0 0
    %441 = vmatprep.subr.bf16.mxu0 0
    %442 = vmatpush1.bf16.msra.mxu0 0
    %443 = vmatprep.mubr.bf16.mxu0 0
    %444 = vmatmul.mubr.bf16.gmra.mrb[0].mxu0 %v302
    %v445 = vpop.f32.mrb[0].mxu0
    %v446 = vadd.f32 %v324, %v445
    %v447 = vpop.f32.mrb[0].mxu0
    %v448 = vadd.f32 %v328, %v447
    %v449 = vpop.f32.mrb[0].mxu0
    %v450 = vpop.f32.mrb[0].mxu0
    %451 = vdwg.mxu0
    %v452 = vmax.f32 %v446, 0.0
    %v453 = vmax.f32 %v448, 0.0
    %v454 = vpack.c.bf16 %v452, %v452
    %v455 = vld [vmem:[#allocation10] sm:$0xf]
    %v456 = vld [vmem:[#allocation10 + $0x4] sm:$0xf]
    %v457 = vld [vmem:[#allocation10 + $0x8] sm:$0xf]
    %v458 = vld [vmem:[#allocation10 + $0xc] sm:$0xf]
    %v459 = vld [vmem:[#allocation10 + $0x10] sm:$0xf]
    %v460 = vld [vmem:[#allocation10 + $0x14] sm:$0xf]
    %v461 = vld [vmem:[#allocation10 + $0x18] sm:$0xf]
    %v462 = vld [vmem:[#allocation10 + $0x1c] sm:$0xf]
    %v463 = vld [vmem:[#allocation10 + $0x20] sm:$0xf]
    %v464 = vld [vmem:[#allocation10 + $0x24] sm:$0xf]
    %v465 = vld [vmem:[#allocation10 + $0x28] sm:$0xf]
    %v466 = vld [vmem:[#allocation10 + $0x2c] sm:$0xf]
    %v467 = vld [vmem:[#allocation10 + $0x30] sm:$0xf]
    %v468 = vld [vmem:[#allocation10 + $0x34] sm:$0xf]
    %v469 = vld [vmem:[#allocation10 + $0x38] sm:$0xf]
    %v470 = vld [vmem:[#allocation10 + $0x3c] sm:$0xf]
    %v471 = vld [vmem:[%s8] sm:$0x1]
    %v473 = vlaneseq
    %v474 = vshrl.u32 %v473, 7
    %v475 = vsub.s32 0, %v474
    %v476 = vrot.slane %v471, %v475
    %v494 = vunpack.c.l.b16 %v455
    %v495 = vunpack.c.l.b16 %v456
    %v496 = vunpack.c.l.b16 %v457
    %v497 = vunpack.c.l.b16 %v458
    %v498 = vunpack.c.l.b16 %v459
    %v499 = vunpack.c.l.b16 %v460
    %v500 = vunpack.c.l.b16 %v461
    %v501 = vunpack.c.l.b16 %v462
    %v502 = vunpack.c.l.b16 %v463
    %v503 = vunpack.c.l.b16 %v464
    %v504 = vunpack.c.l.b16 %v465
    %v505 = vunpack.c.l.b16 %v466
    %v506 = vunpack.c.l.b16 %v467
    %v507 = vunpack.c.l.b16 %v468
    %v508 = vunpack.c.l.b16 %v469
    %v509 = vunpack.c.l.b16 %v470
    %v510 = vpack.c.b16 %v495, %v494
    %v511 = vpack.c.b16 %v497, %v496
    %v512 = vpack.c.b16 %v499, %v498
    %v513 = vpack.c.b16 %v501, %v500
    %v514 = vpack.c.b16 %v503, %v502
    %v515 = vpack.c.b16 %v505, %v504
    %v516 = vpack.c.b16 %v507, %v506
    %v517 = vpack.c.b16 %v509, %v508
    %526 = vmatprep.subr.bf16.mxu0 0
    %527 = vmatpush1.bf16.msra.mxu0 %v510
    %528 = vmatprep.subr.bf16.mxu0 0
    %529 = vmatpush1.bf16.msra.mxu0 %v511
    %530 = vmatprep.subr.bf16.mxu0 0
    %531 = vmatpush1.bf16.msra.mxu0 %v512
    %532 = vmatprep.subr.bf16.mxu0 0
    %533 = vmatpush1.bf16.msra.mxu0 %v513
    %534 = vmatprep.subr.bf16.mxu0 0
    %535 = vmatpush1.bf16.msra.mxu0 %v514
    %536 = vmatprep.subr.bf16.mxu0 0
    %537 = vmatpush1.bf16.msra.mxu0 %v515
    %538 = vmatprep.subr.bf16.mxu0 0
    %539 = vmatpush1.bf16.msra.mxu0 %v516
    %540 = vmatprep.subr.bf16.mxu0 0
    %541 = vmatpush1.bf16.msra.mxu0 %v517
    %542 = vmatprep.subr.bf16.mxu0 0
    %543 = vmatpush1.bf16.msra.mxu0 0
    %544 = vmatprep.subr.bf16.mxu0 0
    %545 = vmatpush1.bf16.msra.mxu0 0
    %546 = vmatprep.subr.bf16.mxu0 0
    %547 = vmatpush1.bf16.msra.mxu0 0
    %548 = vmatprep.subr.bf16.mxu0 0
    %549 = vmatpush1.bf16.msra.mxu0 0
    %550 = vmatprep.subr.bf16.mxu0 0
    %551 = vmatpush1.bf16.msra.mxu0 0
    %552 = vmatprep.subr.bf16.mxu0 0
    %553 = vmatpush1.bf16.msra.mxu0 0
    %554 = vmatprep.subr.bf16.mxu0 0
    %555 = vmatpush1.bf16.msra.mxu0 0
    %556 = vmatprep.subr.bf16.mxu0 0
    %557 = vmatpush1.bf16.msra.mxu0 0
    %558 = vmatprep.mubr.bf16.mxu0 0
    %559 = vmatmul.mubr.bf16.gmra.mrb[0].mxu0 %v454
    %v560 = vpop.f32.mrb[0].mxu0
    %v561 = vadd.f32 %v476, %v560
    %v562 = vpop.f32.mrb[0].mxu0
    %v563 = vpop.f32.mrb[0].mxu0
    %v564 = vpop.f32.mrb[0].mxu0
    %565 = vdwg.mxu0
    %v566 = vld [vmem:[%s9] sm:$0x3]
    %v568 = vlaneseq
    %v569 = vshrl.u32 %v568, 7
    %v570 = vsub.s32 0, %v569
    %v571 = vrot.slane %v566, %v570
    %v572 = vlaneseq
    %v573 = vshrl.u32 %v572, 7
    %v574 = vsub.s32 1, %v573
    %v575 = vrot.slane %v566, %v574
    %v578 = vmul.f32 %v452, %v571
    %v579 = vmul.f32 %v453, %v575
    %vm580 = vcmask 1043456
    %v581 = vsel %vm580, %v578, 0.0
    %v582 = vsel %vm580, %v579, 0.0
    %v583 = vadd.f32 %v581, %v582
    %584 = vadd.xlane.f32.xlu0 %v583
    %v585 = vpop.xlane.xlu0 %584
    %v586 = vadd.f32 %v561, %v585
    %587 = vst [vmem:[#allocation11] sm:$0xf] %v586
    // Predicated region
    $region62: #{tpu_custom_call.1} parent=1 // pred_check
      _
    $region63: #{tpu_custom_call.1} parent=1 // pred_check_branch
      %589 = sbr.rel (0) target = $region65
    $region64: #{tpu_custom_call.1} parent=1 // pred_region
      %s591 = ssub.s32 64, 64
      %592 = vsyncadd [#allocation4], %s591
      %s594 = sshll.u32 [#allocation11], 4
      %s595 = int_to_ptr.vmem [resolvable:$true] %s594
      %597 = dma.vmem_to_hbm [thread:$0]  %s595, 64, %s10, [#allocation4]
    $region65: #{tpu_custom_call.1} parent=1 // pred_fallthru
      _
    // Predicated region
    $region66: #{tpu_custom_call.1} parent=1 // pred_check
      _
    $region67: #{tpu_custom_call.1} parent=1 // pred_check_branch
      %599 = sbr.rel (0) target = $region69
    $region68: #{tpu_custom_call.1} parent=1 // pred_region
      %600 = dma.done [#allocation4], 64
    $region69: #{tpu_custom_call.1} parent=1 // pred_fallthru
      _
    %601 = vsyncpa [#allocation3], 1
    %602 = vsyncpa [#allocation6], 1
    %603 = vsyncpa [#allocation9], 1
    %604 = vsyncpa [#allocation4], 1

</llo_original>
